<compile_context>
chip_gen: v7x
topology: tpu7x:2x2x1
jax: 0.10.0
libtpu: 0.0.40
codegen_flags: <defaults>
</compile_context>

<pallas_src>
import functools

import jax
import jax.numpy as jnp
from jax.experimental import pallas as pl
from jax.experimental.pallas import tpu as pltpu


def _addstcn_kernel(x_ref, att_ref, convw_ref, convb_ref, prelu_ref,
                    combw_ref, combb_ref, o_ref, *bufs,
                    num_levels, kernel_size, dilation_c, pad_left, pad_used):
    """One grid step: Bb batch elements packed into the sublane (channel) axis.

    x_ref   : (1, P, Tp)   P = Bb*C packed channels, Tp = lane-padded time
    att_ref : (P, 1)       softmax(fs_attention) tiled over Bb
    convw   : (L, K, P, 1) depthwise taps (tiled over Bb)
    convb   : (L, P, 1)    depthwise biases
    prelu   : (L, P, 1)    PReLU slopes
    combw   : (Bb, P)      block-diagonal fused (LastBlock Linear + pointwise) W
    combb   : (1, 1)       fused bias
    o_ref   : (1, Bb, Tp)
    bufs    : 1 or 2 ping-pong VMEM buffers, each (P, pad_left + Tp)
    """
    _, P, Tp = x_ref.shape
    K = kernel_size
    R = pad_left          # lane-aligned halo width in the scratch buffers
    Ru = pad_used         # halo lanes actually read (max causal shift)

    att = att_ref[...]                                  # (P, 1)
    conv_w = convw_ref[...]                             # (L, K, P, 1)
    conv_b = convb_ref[...]                             # (L, P, 1)
    prelu = prelu_ref[...]                              # (L, P, 1)

    # Zero only the halo lanes that are ever read.  Done every grid step: under
    # "parallel" semantics each TensorCore has private scratch, so no
    # program_id gating (and it is tiny: (P, Ru) per buffer).
    if Ru > 0:
        for buf in bufs:
            buf[:, R - Ru:R] = jnp.zeros((P, Ru), jnp.float32)

    # Level-0 input: x * softmax(fs_attention), written once into buffer 0.
    bufs[0][:, R:] = x_ref[0] * att

    for l in range(num_levels):
        src = bufs[l % len(bufs)]
        d = dilation_c ** l
        h = src[:, R:]                                  # (P, Tp) current features

        # Causal dilated depthwise conv: VPU MACs over K taps.  Tap k = K-1 has
        # shift 0 — use it to initialize the accumulator with the bias folded in.
        acc = conv_w[l, K - 1] * h + conv_b[l]
        for k in range(K - 1):
            s = (K - 1 - k) * d                         # static causal shift
            acc = acc + conv_w[l, k] * src[:, R - s:R - s + Tp]

        if l == 0:
            # FirstBlock: PReLU(conv(x))   (also covers num_levels == 1)
            a = prelu[l]
            out = jnp.where(acc >= 0, acc, a * acc)
        elif l == num_levels - 1:
            # LastBlock: residual only; its channel Linear is folded into combw/combb.
            out = acc + h
        else:
            # TemporalBlock: PReLU(conv(x) + x)
            a = prelu[l]
            z = acc + h
            out = jnp.where(z >= 0, z, a * z)

        if l == num_levels - 1:
            # Fused (LastBlock Linear + pointwise Conv1d): block-diagonal matmul
            # over the packed channel axis -> dense (Bb, Tp) output tile.
            y = jnp.dot(combw_ref[...], out, preferred_element_type=jnp.float32)
            o_ref[0] = (y + combb_ref[...]).astype(o_ref.dtype)
        else:
            # Ping-pong: level output written directly into the other padded
            # buffer's data region (no separate "re-store h" copy).
            bufs[(l + 1) % len(bufs)][:, R:] = out


def _choose_batch_block(B, C, Tp, R_lane, nbuf, budget_bytes):
    """Pick Bb: fill f32 sublanes (8/C), stay under the VMEM budget, and keep
    >= 2 grid steps when the batch allows it (megacore sharding + DMA depth)."""
    def footprint(bb):
        P = bb * C
        scratch = nbuf * P * (R_lane + Tp) * 4
        io = (2 * P * Tp + 2 * bb * Tp) * 4             # double-buffered in/out
        return scratch + io

    bb = min(B, max(1, 8 // C)) if C < 8 else 1
    bb = max(1, bb)
    while bb > 1 and footprint(bb) > budget_bytes:
        bb = max(1, bb // 2)
    while True:
        nxt = bb * 2
        if nxt > B or footprint(nxt) > budget_bytes:
            break
        if -(-B // nxt) < 2 and -(-B // bb) >= 2:
            break                                       # keep >= 2 grid steps
        bb = nxt
    return bb


def addstcn_forward(x, params, *, num_levels, kernel_size, dilation_c,
                    batch_block=None):
    x = x.astype(jnp.float32)
    B, C, T = x.shape
    L, K = num_levels, kernel_size

    # ---- hoisted / folded parameter prep (plain JAX, done once) -------------
    att = jax.nn.softmax(params["att"].astype(jnp.float32), axis=0)            # (C, 1)
    conv_w = jnp.transpose(params["conv_w"].astype(jnp.float32), (0, 2, 1))[..., None]  # (L,K,C,1)
    conv_b = params["conv_b"].astype(jnp.float32)                              # (L, C, 1)
    prelu = params["prelu"].astype(jnp.float32)                                # (L, C, 1)
    pw_w = params["pw_w"].astype(jnp.float32)                                  # (1, C)
    pw_b = params["pw_b"].astype(jnp.float32)                                  # (1, 1)
    if L > 1:
        # pointwise( Linear(z) ) == (pw_w @ lin_w) z + (pw_w @ lin_b + pw_b)
        comb_vec = pw_w @ params["lin_w"].astype(jnp.float32)                  # (1, C)
        comb_b = pw_w @ params["lin_b"].astype(jnp.float32) + pw_b             # (1, 1)
    else:
        comb_vec = pw_w
        comb_b = pw_b

    # ---- layout: lane-pad T, pack batch into the sublane (channel) axis -----
    Tp = ((T + 127) // 128) * 128
    R_used = (K - 1) * (dilation_c ** (L - 1))          # max causal shift
    R_lane = 0 if R_used == 0 else ((R_used + 127) // 128) * 128
    nbuf = 1 if L == 1 else 2

    try:
        vmem_cap = int(getattr(pltpu.get_tpu_info(), "vmem_capacity_bytes",
                               64 * 1024 * 1024))
    except Exception:
        vmem_cap = 64 * 1024 * 1024                     # safe on all generations

    if batch_block is None:
        Bb = _choose_batch_block(B, C, Tp, R_lane, nbuf, vmem_cap // 2)
    else:
        Bb = max(1, min(B, batch_block))
    G = -(-B // Bb)
    Bp = G * Bb
    P = Bb * C

    xp = x
    if Tp != T:
        xp = jnp.pad(xp, ((0, 0), (0, 0), (0, Tp - T)))
    if Bp != B:
        xp = jnp.pad(xp, ((0, Bp - B), (0, 0), (0, 0)))
    xp = xp.reshape(G, P, Tp)                           # packed channel p = b*C + c

    # Tile per-channel params over the Bb batch elements packed per block.
    att_t = jnp.tile(att, (Bb, 1))                      # (P, 1)
    conv_w_t = jnp.tile(conv_w, (1, 1, Bb, 1))          # (L, K, P, 1)
    conv_b_t = jnp.tile(conv_b, (1, Bb, 1))             # (L, P, 1)
    prelu_t = jnp.tile(prelu, (1, Bb, 1))               # (L, P, 1)
    comb_w_blk = jnp.kron(jnp.eye(Bb, dtype=jnp.float32), comb_vec)  # (Bb, P)

    # ---- VMEM budgeting (generation-aware) -----------------------------------
    scratch_bytes = nbuf * P * (R_lane + Tp) * 4
    io_bytes = (2 * P * Tp + 2 * Bb * Tp) * 4
    param_bytes = 8 * (P + L * K * P + 2 * L * P + Bb * P + 1)
    vmem_needed = scratch_bytes + io_bytes + param_bytes
    vmem_limit = int(min(vmem_cap, max(2 * vmem_needed, 32 * 1024 * 1024)))

    flops = int(G * (2 * L * K * P * Tp + 6 * L * P * Tp + 2 * Bb * P * Tp))
    bytes_accessed = int(4 * (G * P * Tp + G * Bb * Tp) + param_bytes // 2)

    kernel = functools.partial(
        _addstcn_kernel, num_levels=L, kernel_size=K, dilation_c=dilation_c,
        pad_left=R_lane, pad_used=R_used)

    y = pl.pallas_call(
        kernel,
        out_shape=jax.ShapeDtypeStruct((G, Bb, Tp), jnp.float32),
        grid=(G,),
        in_specs=[
            pl.BlockSpec((1, P, Tp), lambda g: (g, 0, 0)),         # packed x
            pl.BlockSpec(att_t.shape, lambda g: (0, 0)),           # softmax(att)
            pl.BlockSpec(conv_w_t.shape, lambda g: (0, 0, 0, 0)),  # depthwise taps
            pl.BlockSpec(conv_b_t.shape, lambda g: (0, 0, 0)),     # depthwise biases
            pl.BlockSpec(prelu_t.shape, lambda g: (0, 0, 0)),      # PReLU slopes
            pl.BlockSpec(comb_w_blk.shape, lambda g: (0, 0)),      # fused block-diag W
            pl.BlockSpec(comb_b.shape, lambda g: (0, 0)),          # fused bias
        ],
        out_specs=pl.BlockSpec((1, Bb, Tp), lambda g: (g, 0, 0)),
        scratch_shapes=[pltpu.VMEM((P, R_lane + Tp), jnp.float32)
                        for _ in range(nbuf)],
        compiler_params=pltpu.CompilerParams(
            dimension_semantics=("parallel",),
            vmem_limit_bytes=vmem_limit),
        cost_estimate=pl.CostEstimate(flops=flops, transcendentals=0,
                                      bytes_accessed=bytes_accessed),
    )(xp, att_t, conv_w_t, conv_b_t, prelu_t, comb_w_blk, comb_b)

    # (G, Bb, Tp) -> (B, T) ; module returns y1.transpose(1, 2): (B, T, 1)
    y = y.reshape(Bp, Tp)[:B, :T]
    return y[:, :, None]


def addstcn_reference(x, params, *, num_levels, kernel_size, dilation_c):
    """Pure-JAX reference (unfused) for correctness checking."""
    x = x.astype(jnp.float32)
    B, C, T = x.shape
    K = kernel_size
    att = jax.nn.softmax(params["att"], axis=0)
    h = x * att[None]

    def causal_dw_conv(h, w, b, d):
        R = (K - 1) * d
        hp = jnp.pad(h, ((0, 0), (0, 0), (R, 0)))
        out = jnp.zeros_like(h)
        for k in range(K):
            s = (K - 1 - k) * d
            out = out + w[None, :, k:k + 1] * hp[:, :, R - s:R - s + T]
        return out + b[None]

    for l in range(num_levels):
        d = dilation_c ** l
        out = causal_dw_conv(h, params["conv_w"][l], params["conv_b"][l], d)
        ap = params["prelu"][l][None]
        if l == 0:
            h = jnp.where(out >= 0, out, ap * out)
        elif l == num_levels - 1:
            z = out + h
            h = jnp.einsum("ij,bjt->bit", params["lin_w"], z) + params["lin_b"][None]
        else:
            z = out + h
            h = jnp.where(z >= 0, z, ap * z)
    y = jnp.einsum("oc,bct->bot", params["pw_w"], h) + params["pw_b"][None]
    return jnp.transpose(y, (0, 2, 1))


if __name__ == "__main__":
    # Small shapes consistent with the module: Conv1d input (N, C, T)
    B, C, T = 2, 4, 16
    num_levels, kernel_size, dilation_c = 3, 2, 2

    key = jax.random.PRNGKey(0)
    ks = jax.random.split(key, 7)

    params = {
        # nn.Parameter(th.ones(input_size, 1)) -> softmax over dim 0 in forward
        "att": jnp.ones((C, 1), jnp.float32),
        # depthwise Conv1d weights (groups=C): torch (C,1,K) stored as (L, C, K)
        "conv_w": 0.1 * jax.random.normal(ks[0], (num_levels, C, kernel_size), jnp.float32),
        "conv_b": 0.05 * jax.random.normal(ks[1], (num_levels, C, 1), jnp.float32),
        # nn.PReLU(C) default slope 0.25 (unused at the last level)
        "prelu": jnp.full((num_levels, C, 1), 0.25, jnp.float32),
        # LastBlock nn.Linear(C, C), weight ~ N(0, 0.01)
        "lin_w": 0.01 * jax.random.normal(ks[2], (C, C), jnp.float32),
        "lin_b": 0.05 * jax.random.normal(ks[3], (C, 1), jnp.float32),
        # pointwise nn.Conv1d(C, 1, 1): weight (1, C, 1) -> (1, C), bias (1,)
        "pw_w": 0.5 * jax.random.normal(ks[4], (1, C), jnp.float32),
        "pw_b": 0.05 * jax.random.normal(ks[5], (1, 1), jnp.float32),
    }

    x = jax.random.normal(ks[6], (B, C, T), jnp.float32)

    out = addstcn_forward(x, params, num_levels=num_levels,
                          kernel_size=kernel_size, dilation_c=dilation_c)
    out = jax.block_until_ready(out)
    assert out.shape == (B, T, 1), out.shape

    ref = addstcn_reference(x, params, num_levels=num_levels,
                            kernel_size=kernel_size, dilation_c=dilation_c)
    err = float(jnp.max(jnp.abs(out - ref)))
    assert err < 1e-4, f"max abs err {err}"

    print("KERNEL_OK")
</pallas_src>

<mosaic_0001>
module attributes {stable_mosaic.version = 11 : i64} {
  func.func @_addstcn_kernel(%arg0: i32, %arg1: memref<1x8x128xf32, #tpu.memory_space<vmem>>, %arg2: memref<8x1xf32, #tpu.memory_space<vmem>>, %arg3: memref<3x2x8x1xf32, #tpu.memory_space<vmem>>, %arg4: memref<3x8x1xf32, #tpu.memory_space<vmem>>, %arg5: memref<3x8x1xf32, #tpu.memory_space<vmem>>, %arg6: memref<2x8xf32, #tpu.memory_space<vmem>>, %arg7: memref<1x1xf32, #tpu.memory_space<vmem>>, %arg8: memref<1x2x128xf32, #tpu.memory_space<vmem>>, %arg9: memref<8x256xf32, #tpu.memory_space<vmem>>, %arg10: memref<8x256xf32, #tpu.memory_space<vmem>>) attributes {dimension_semantics = [#tpu.dimension_semantics<parallel>], iteration_bounds = array<i64: 1>, scalar_prefetch = 0 : i64, scratch_operands = 2 : i64, tpu.core_type = #tpu.core_type<tc>, window_params = [{transform_indices = @transform_0, window_bounds = array<i64: 1, 8, 128>}, {pipeline_mode = #tpu.pipeline_mode<synchronous>, transform_indices = @transform_1, window_bounds = array<i64: 8, 1>}, {pipeline_mode = #tpu.pipeline_mode<synchronous>, transform_indices = @transform_2, window_bounds = array<i64: 3, 2, 8, 1>}, {pipeline_mode = #tpu.pipeline_mode<synchronous>, transform_indices = @transform_3, window_bounds = array<i64: 3, 8, 1>}, {pipeline_mode = #tpu.pipeline_mode<synchronous>, transform_indices = @transform_4, window_bounds = array<i64: 3, 8, 1>}, {pipeline_mode = #tpu.pipeline_mode<synchronous>, transform_indices = @transform_5, window_bounds = array<i64: 2, 8>}, {pipeline_mode = #tpu.pipeline_mode<synchronous>, transform_indices = @transform_6, window_bounds = array<i64: 1, 1>}, {transform_indices = @transform_7, window_bounds = array<i64: 1, 2, 128>}]} {
    %c0 = arith.constant 0 : index
    %c0_0 = arith.constant 0 : index
    %0 = vector.load %arg2[%c0, %c0_0] : memref<8x1xf32, #tpu.memory_space<vmem>>, vector<8x1xf32>
    %c0_1 = arith.constant 0 : index
    %c0_2 = arith.constant 0 : index
    %c0_3 = arith.constant 0 : index
    %c0_4 = arith.constant 0 : index
    %1 = vector.load %arg3[%c0_1, %c0_2, %c0_3, %c0_4] : memref<3x2x8x1xf32, #tpu.memory_space<vmem>>, vector<3x2x8x1xf32>
    %c0_5 = arith.constant 0 : index
    %c0_6 = arith.constant 0 : index
    %c0_7 = arith.constant 0 : index
    %2 = vector.load %arg4[%c0_5, %c0_6, %c0_7] : memref<3x8x1xf32, #tpu.memory_space<vmem>>, vector<3x8x1xf32>
    %c0_8 = arith.constant 0 : index
    %c0_9 = arith.constant 0 : index
    %c0_10 = arith.constant 0 : index
    %3 = vector.load %arg5[%c0_8, %c0_9, %c0_10] : memref<3x8x1xf32, #tpu.memory_space<vmem>>, vector<3x8x1xf32>
    %cst = arith.constant 0.000000e+00 : f32
    %4 = vector.broadcast %cst : f32 to vector<8x4xf32>
    %c0_11 = arith.constant 0 : index
    %c124 = arith.constant 124 : index
    %5 = vector.load %arg9[%c0_11, %c124] : memref<8x256xf32, #tpu.memory_space<vmem>>, vector<8x4xf32>
    tpu.vector_store %arg9[%c0_11, %c124], %4 {strides = array<i32>} : memref<8x256xf32, #tpu.memory_space<vmem>>, vector<8x4xf32>,
    %cst_12 = arith.constant 0.000000e+00 : f32
    %6 = vector.broadcast %cst_12 : f32 to vector<8x4xf32>
    %c0_13 = arith.constant 0 : index
    %c124_14 = arith.constant 124 : index
    %7 = vector.load %arg10[%c0_13, %c124_14] : memref<8x256xf32, #tpu.memory_space<vmem>>, vector<8x4xf32>
    tpu.vector_store %arg10[%c0_13, %c124_14], %6 {strides = array<i32>} : memref<8x256xf32, #tpu.memory_space<vmem>>, vector<8x4xf32>,
    %c0_15 = arith.constant 0 : index
    %c0_16 = arith.constant 0 : index
    %c0_17 = arith.constant 0 : index
    %8 = vector.load %arg1[%c0_15, %c0_16, %c0_17] : memref<1x8x128xf32, #tpu.memory_space<vmem>>, vector<1x8x128xf32>
    %9 = vector.shape_cast %8 : vector<1x8x128xf32> to vector<8x128xf32>
    %10 = vector.broadcast %0 : vector<8x1xf32> to vector<8x128xf32>
    %11 = arith.mulf %9, %10 : vector<8x128xf32>
    %c0_18 = arith.constant 0 : index
    %c128 = arith.constant 128 : index
    %12 = vector.load %arg9[%c0_18, %c128] : memref<8x256xf32, #tpu.memory_space<vmem>>, vector<8x128xf32>
    tpu.vector_store %arg9[%c0_18, %c128], %11 {strides = array<i32>} : memref<8x256xf32, #tpu.memory_space<vmem>>, vector<8x128xf32>,
    %c0_19 = arith.constant 0 : index
    %c128_20 = arith.constant 128 : index
    %13 = vector.load %arg9[%c0_19, %c128_20] : memref<8x256xf32, #tpu.memory_space<vmem>>, vector<8x128xf32>
    %14 = vector.extract_strided_slice %1 {offsets = [0, 1, 0, 0], sizes = [1, 1, 8, 1], strides = [1, 1, 1, 1]} : vector<3x2x8x1xf32> to vector<1x1x8x1xf32>
    %15 = vector.shape_cast %14 : vector<1x1x8x1xf32> to vector<8x1xf32>
    %16 = vector.broadcast %15 : vector<8x1xf32> to vector<8x128xf32>
    %17 = arith.mulf %16, %13 : vector<8x128xf32>
    %18 = vector.extract_strided_slice %2 {offsets = [0, 0, 0], sizes = [1, 8, 1], strides = [1, 1, 1]} : vector<3x8x1xf32> to vector<1x8x1xf32>
    %19 = vector.shape_cast %18 : vector<1x8x1xf32> to vector<8x1xf32>
    %20 = vector.broadcast %19 : vector<8x1xf32> to vector<8x128xf32>
    %21 = arith.addf %17, %20 : vector<8x128xf32>
    %22 = vector.extract_strided_slice %1 {offsets = [0, 0, 0, 0], sizes = [1, 1, 8, 1], strides = [1, 1, 1, 1]} : vector<3x2x8x1xf32> to vector<1x1x8x1xf32>
    %23 = vector.shape_cast %22 : vector<1x1x8x1xf32> to vector<8x1xf32>
    %c0_21 = arith.constant 0 : index
    %c127 = arith.constant 127 : index
    %24 = vector.load %arg9[%c0_21, %c127] : memref<8x256xf32, #tpu.memory_space<vmem>>, vector<8x128xf32>
    %25 = vector.broadcast %23 : vector<8x1xf32> to vector<8x128xf32>
    %26 = arith.mulf %25, %24 : vector<8x128xf32>
    %27 = arith.addf %21, %26 : vector<8x128xf32>
    %28 = vector.extract_strided_slice %3 {offsets = [0, 0, 0], sizes = [1, 8, 1], strides = [1, 1, 1]} : vector<3x8x1xf32> to vector<1x8x1xf32>
    %29 = vector.shape_cast %28 : vector<1x8x1xf32> to vector<8x1xf32>
    %cst_22 = arith.constant 0.000000e+00 : f32
    %30 = vector.broadcast %cst_22 : f32 to vector<8x128xf32>
    %31 = arith.cmpf oge, %27, %30 : vector<8x128xf32>
    %32 = vector.broadcast %29 : vector<8x1xf32> to vector<8x128xf32>
    %33 = arith.mulf %32, %27 : vector<8x128xf32>
    %34 = arith.select %31, %27, %33 : vector<8x128xi1>, vector<8x128xf32>
    %c0_23 = arith.constant 0 : index
    %c128_24 = arith.constant 128 : index
    %35 = vector.load %arg10[%c0_23, %c128_24] : memref<8x256xf32, #tpu.memory_space<vmem>>, vector<8x128xf32>
    tpu.vector_store %arg10[%c0_23, %c128_24], %34 {strides = array<i32>} : memref<8x256xf32, #tpu.memory_space<vmem>>, vector<8x128xf32>,
    %c0_25 = arith.constant 0 : index
    %c128_26 = arith.constant 128 : index
    %36 = vector.load %arg10[%c0_25, %c128_26] : memref<8x256xf32, #tpu.memory_space<vmem>>, vector<8x128xf32>
    %37 = vector.extract_strided_slice %1 {offsets = [1, 1, 0, 0], sizes = [1, 1, 8, 1], strides = [1, 1, 1, 1]} : vector<3x2x8x1xf32> to vector<1x1x8x1xf32>
    %38 = vector.shape_cast %37 : vector<1x1x8x1xf32> to vector<8x1xf32>
    %39 = vector.broadcast %38 : vector<8x1xf32> to vector<8x128xf32>
    %40 = arith.mulf %39, %36 : vector<8x128xf32>
    %41 = vector.extract_strided_slice %2 {offsets = [1, 0, 0], sizes = [1, 8, 1], strides = [1, 1, 1]} : vector<3x8x1xf32> to vector<1x8x1xf32>
    %42 = vector.shape_cast %41 : vector<1x8x1xf32> to vector<8x1xf32>
    %43 = vector.broadcast %42 : vector<8x1xf32> to vector<8x128xf32>
    %44 = arith.addf %40, %43 : vector<8x128xf32>
    %45 = vector.extract_strided_slice %1 {offsets = [1, 0, 0, 0], sizes = [1, 1, 8, 1], strides = [1, 1, 1, 1]} : vector<3x2x8x1xf32> to vector<1x1x8x1xf32>
    %46 = vector.shape_cast %45 : vector<1x1x8x1xf32> to vector<8x1xf32>
    %c0_27 = arith.constant 0 : index
    %c126 = arith.constant 126 : index
    %47 = vector.load %arg10[%c0_27, %c126] : memref<8x256xf32, #tpu.memory_space<vmem>>, vector<8x128xf32>
    %48 = vector.broadcast %46 : vector<8x1xf32> to vector<8x128xf32>
    %49 = arith.mulf %48, %47 : vector<8x128xf32>
    %50 = arith.addf %44, %49 : vector<8x128xf32>
    %51 = vector.extract_strided_slice %3 {offsets = [1, 0, 0], sizes = [1, 8, 1], strides = [1, 1, 1]} : vector<3x8x1xf32> to vector<1x8x1xf32>
    %52 = vector.shape_cast %51 : vector<1x8x1xf32> to vector<8x1xf32>
    %53 = arith.addf %50, %36 : vector<8x128xf32>
    %cst_28 = arith.constant 0.000000e+00 : f32
    %54 = vector.broadcast %cst_28 : f32 to vector<8x128xf32>
    %55 = arith.cmpf oge, %53, %54 : vector<8x128xf32>
    %56 = vector.broadcast %52 : vector<8x1xf32> to vector<8x128xf32>
    %57 = arith.mulf %56, %53 : vector<8x128xf32>
    %58 = arith.select %55, %53, %57 : vector<8x128xi1>, vector<8x128xf32>
    %c0_29 = arith.constant 0 : index
    %c128_30 = arith.constant 128 : index
    %59 = vector.load %arg9[%c0_29, %c128_30] : memref<8x256xf32, #tpu.memory_space<vmem>>, vector<8x128xf32>
    tpu.vector_store %arg9[%c0_29, %c128_30], %58 {strides = array<i32>} : memref<8x256xf32, #tpu.memory_space<vmem>>, vector<8x128xf32>,
    %c0_31 = arith.constant 0 : index
    %c128_32 = arith.constant 128 : index
    %60 = vector.load %arg9[%c0_31, %c128_32] : memref<8x256xf32, #tpu.memory_space<vmem>>, vector<8x128xf32>
    %61 = vector.extract_strided_slice %1 {offsets = [2, 1, 0, 0], sizes = [1, 1, 8, 1], strides = [1, 1, 1, 1]} : vector<3x2x8x1xf32> to vector<1x1x8x1xf32>
    %62 = vector.shape_cast %61 : vector<1x1x8x1xf32> to vector<8x1xf32>
    %63 = vector.broadcast %62 : vector<8x1xf32> to vector<8x128xf32>
    %64 = arith.mulf %63, %60 : vector<8x128xf32>
    %65 = vector.extract_strided_slice %2 {offsets = [2, 0, 0], sizes = [1, 8, 1], strides = [1, 1, 1]} : vector<3x8x1xf32> to vector<1x8x1xf32>
    %66 = vector.shape_cast %65 : vector<1x8x1xf32> to vector<8x1xf32>
    %67 = vector.broadcast %66 : vector<8x1xf32> to vector<8x128xf32>
    %68 = arith.addf %64, %67 : vector<8x128xf32>
    %69 = vector.extract_strided_slice %1 {offsets = [2, 0, 0, 0], sizes = [1, 1, 8, 1], strides = [1, 1, 1, 1]} : vector<3x2x8x1xf32> to vector<1x1x8x1xf32>
    %70 = vector.shape_cast %69 : vector<1x1x8x1xf32> to vector<8x1xf32>
    %c0_33 = arith.constant 0 : index
    %c124_34 = arith.constant 124 : index
    %71 = vector.load %arg9[%c0_33, %c124_34] : memref<8x256xf32, #tpu.memory_space<vmem>>, vector<8x128xf32>
    %72 = vector.broadcast %70 : vector<8x1xf32> to vector<8x128xf32>
    %73 = arith.mulf %72, %71 : vector<8x128xf32>
    %74 = arith.addf %68, %73 : vector<8x128xf32>
    %75 = arith.addf %74, %60 : vector<8x128xf32>
    %c0_35 = arith.constant 0 : index
    %c0_36 = arith.constant 0 : index
    %76 = vector.load %arg6[%c0_35, %c0_36] : memref<2x8xf32, #tpu.memory_space<vmem>>, vector<2x8xf32>
    %cst_37 = arith.constant dense<0.000000e+00> : vector<2x128xf32>
    %77 = tpu.matmul %76, %75, %cst_37 {dimension_numbers = #tpu.dot_dimension_numbers<[1], [0], [0], [1], [0, 0, 1, 1], [], []>} : vector<2x8xf32>, vector<8x128xf32>, vector<2x128xf32> -> vector<2x128xf32>
    %c0_38 = arith.constant 0 : index
    %c0_39 = arith.constant 0 : index
    %78 = vector.load %arg7[%c0_38, %c0_39] : memref<1x1xf32, #tpu.memory_space<vmem>>, vector<1x1xf32>
    %79 = vector.broadcast %78 : vector<1x1xf32> to vector<2x128xf32>
    %80 = arith.addf %77, %79 : vector<2x128xf32>
    %c0_40 = arith.constant 0 : index
    %c0_41 = arith.constant 0 : index
    %c0_42 = arith.constant 0 : index
    %81 = vector.load %arg8[%c0_40, %c0_41, %c0_42] : memref<1x2x128xf32, #tpu.memory_space<vmem>>, vector<1x2x128xf32>
    %82 = vector.shape_cast %81 : vector<1x2x128xf32> to vector<2x128xf32>
    %83 = vector.shape_cast %80 : vector<2x128xf32> to vector<1x2x128xf32>
    tpu.vector_store %arg8[%c0_40, %c0_41, %c0_42], %83 {strides = array<i32>} : memref<1x2x128xf32, #tpu.memory_space<vmem>>, vector<1x2x128xf32>,
    return
  }
  func.func @transform_0(%arg0: i32) -> (i32, i32, i32) {
    %c0_i32 = arith.constant 0 : i32
    %c0_i32_0 = arith.constant 0 : i32
    %c0_i32_1 = arith.constant 0 : i32
    return %arg0, %c0_i32, %c0_i32_0 : i32, i32, i32
  }
  func.func @transform_1(%arg0: i32) -> (i32, i32) {
    %c0_i32 = arith.constant 0 : i32
    %c0_i32_0 = arith.constant 0 : i32
    %c0_i32_1 = arith.constant 0 : i32
    return %c0_i32, %c0_i32_0 : i32, i32
  }
  func.func @transform_2(%arg0: i32) -> (i32, i32, i32, i32) {
    %c0_i32 = arith.constant 0 : i32
    %c0_i32_0 = arith.constant 0 : i32
    %c0_i32_1 = arith.constant 0 : i32
    %c0_i32_2 = arith.constant 0 : i32
    %c0_i32_3 = arith.constant 0 : i32
    return %c0_i32, %c0_i32_0, %c0_i32_1, %c0_i32_2 : i32, i32, i32, i32
  }
  func.func @transform_3(%arg0: i32) -> (i32, i32, i32) {
    %c0_i32 = arith.constant 0 : i32
    %c0_i32_0 = arith.constant 0 : i32
    %c0_i32_1 = arith.constant 0 : i32
    %c0_i32_2 = arith.constant 0 : i32
    return %c0_i32, %c0_i32_0, %c0_i32_1 : i32, i32, i32
  }
  func.func @transform_4(%arg0: i32) -> (i32, i32, i32) {
    %c0_i32 = arith.constant 0 : i32
    %c0_i32_0 = arith.constant 0 : i32
    %c0_i32_1 = arith.constant 0 : i32
    %c0_i32_2 = arith.constant 0 : i32
    return %c0_i32, %c0_i32_0, %c0_i32_1 : i32, i32, i32
  }
  func.func @transform_5(%arg0: i32) -> (i32, i32) {
    %c0_i32 = arith.constant 0 : i32
    %c0_i32_0 = arith.constant 0 : i32
    %c0_i32_1 = arith.constant 0 : i32
    return %c0_i32, %c0_i32_0 : i32, i32
  }
  func.func @transform_6(%arg0: i32) -> (i32, i32) {
    %c0_i32 = arith.constant 0 : i32
    %c0_i32_0 = arith.constant 0 : i32
    %c0_i32_1 = arith.constant 0 : i32
    return %c0_i32, %c0_i32_0 : i32, i32
  }
  func.func @transform_7(%arg0: i32) -> (i32, i32, i32) {
    %c0_i32 = arith.constant 0 : i32
    %c0_i32_0 = arith.constant 0 : i32
    %c0_i32_1 = arith.constant 0 : i32
    return %arg0, %c0_i32, %c0_i32_0 : i32, i32, i32
  }
}

</mosaic_0001>

<llo_original>
// kernel: tpu_custom_call.1
$region0: #{tpu_custom_call.1}
  #allocation0 [shape = 'u32[]', space=smem, size = 0x4, offset = 0x4, fixed_abs, tag = 'smem constant byte address 0x4 - core index']
  #allocation1 [shape = 'u32[144,128]{1,0:T(1,128)}', space=vmem, size = 0x12000, scoped, tag = 'internal scratch']
  #allocation2 [shape = 'f32[8,256]{1,0:T(8,128)}', space=vmem, size = 0x2000, scoped, tag = 'scratch operand']
  #allocation3 [shape = 'f32[8,256]{1,0:T(8,128)}', space=vmem, size = 0x2000, scoped, tag = 'scratch operand']
  #allocation4 [shape = 'f32[1,1]{1,0:T(1,128)S(1)}', space=vmem, size = 0x200, scoped, tag = 'scoped memory for tpu_custom_call.1']
  %s0 = inlined_call_operand.vmem [shape: f32[1,8,128], index: 0, kind: input, shape index: {}]
  %s1 = inlined_call_operand.vmem [shape: f32[8,1], index: 1, kind: input, shape index: {}]
  %s2 = inlined_call_operand.vmem [shape: f32[3,2,8,1], index: 2, kind: input, shape index: {}]
  %s3 = inlined_call_operand.vmem [shape: f32[3,8,1], index: 3, kind: input, shape index: {}]
  %s4 = inlined_call_operand.vmem [shape: f32[3,8,1], index: 4, kind: input, shape index: {}]
  %s5 = inlined_call_operand.vmem [shape: f32[2,8], index: 5, kind: input, shape index: {}]
  %s6 = inlined_call_operand.<no memory space> [shape: f32[1,1], index: 6, kind: input, shape index: {}]
  %s7 = inlined_call_operand.hbm [shape: f32[1,2,128], index: 7, kind: output, shape index: {}]
  %s8 = sld [smem:[#allocation0]]
  $region38: #{tpu_custom_call.1} parent=0
    _
  %s10 = ssub.s32 1, %s8
  %s11 = scalar_select 0, %s10, %s8
  %v12 = vstv %s6
  %13 = vst [vmem:[#allocation4] sm:$0x1] %v12
  $region1: #{tpu_custom_call.1} parent=0
    #allocation5 [shape = 'u8[1024]{0}', space=vmem, size = 0x400, scoped, tag = 'output window, operand 0, single buffered']
    #allocation6 [shape = 's32[1]{0}', space=sflag, size = 0x4, scoped, tag = 'scoped memory for tpu_custom_call.1']
    %14 = vsyncpa [#allocation6], 0
    // Predicated region
    $region2: #{tpu_custom_call.1} parent=1 // pred_check
      _
    $region3: #{tpu_custom_call.1} parent=1 // pred_check_branch
      %16 = sbr.rel (0) target = $region5
    $region4: #{tpu_custom_call.1} parent=1 // pred_region
      _
    $region5: #{tpu_custom_call.1} parent=1 // pred_fallthru
      _
    // Predicated region
    $region6: #{tpu_custom_call.1} parent=1 // pred_check
      _
    $region7: #{tpu_custom_call.1} parent=1 // pred_check_branch
      %18 = sbr.rel (0) target = $region9
    $region8: #{tpu_custom_call.1} parent=1 // pred_region
      _
    $region9: #{tpu_custom_call.1} parent=1 // pred_fallthru
      _
    // Predicated region
    $region10: #{tpu_custom_call.1} parent=1 // pred_check
      _
    $region11: #{tpu_custom_call.1} parent=1 // pred_check_branch
      %20 = sbr.rel (0) target = $region13
    $region12: #{tpu_custom_call.1} parent=1 // pred_region
      _
    $region13: #{tpu_custom_call.1} parent=1 // pred_fallthru
      _
    // Predicated region
    $region14: #{tpu_custom_call.1} parent=1 // pred_check
      _
    $region15: #{tpu_custom_call.1} parent=1 // pred_check_branch
      %22 = sbr.rel (0) target = $region17
    $region16: #{tpu_custom_call.1} parent=1 // pred_region
      _
    $region17: #{tpu_custom_call.1} parent=1 // pred_fallthru
      _
    // Predicated region
    $region18: #{tpu_custom_call.1} parent=1 // pred_check
      _
    $region19: #{tpu_custom_call.1} parent=1 // pred_check_branch
      %24 = sbr.rel (0) target = $region21
    $region20: #{tpu_custom_call.1} parent=1 // pred_region
      _
    $region21: #{tpu_custom_call.1} parent=1 // pred_fallthru
      _
    // Predicated region
    $region22: #{tpu_custom_call.1} parent=1 // pred_check
      _
    $region23: #{tpu_custom_call.1} parent=1 // pred_check_branch
      %26 = sbr.rel (0) target = $region25
    $region24: #{tpu_custom_call.1} parent=1 // pred_region
      _
    $region25: #{tpu_custom_call.1} parent=1 // pred_fallthru
      _
    // Predicated region
    $region26: #{tpu_custom_call.1} parent=1 // pred_check
      _
    $region27: #{tpu_custom_call.1} parent=1 // pred_check_branch
      %28 = sbr.rel (0) target = $region29
    $region28: #{tpu_custom_call.1} parent=1 // pred_region
      _
    $region29: #{tpu_custom_call.1} parent=1 // pred_fallthru
      _
    %v29 = vld [vmem:[%s1] sm:$0xff]
    %v30 = vld [vmem:[%s2] sm:$0xff]
    %v31 = vld [vmem:[%s2 + $0x8] sm:$0xff]
    %v32 = vld [vmem:[%s2 + $0x10] sm:$0xff]
    %v33 = vld [vmem:[%s2 + $0x18] sm:$0xff]
    %v34 = vld [vmem:[%s2 + $0x20] sm:$0xff]
    %v35 = vld [vmem:[%s2 + $0x28] sm:$0xff]
    %v36 = vld [vmem:[%s3] sm:$0xff]
    %v37 = vld [vmem:[%s3 + $0x8] sm:$0xff]
    %v38 = vld [vmem:[%s3 + $0x10] sm:$0xff]
    %v39 = vld [vmem:[%s4] sm:$0xff]
    %v40 = vld [vmem:[%s4 + $0x8] sm:$0xff]
    %vm41 = vcmask 1048544
    %42 = vst.msk [vmem:[#allocation2] sm:$0xff] %vm41, 0.0
    %43 = vst.msk [vmem:[#allocation3] sm:$0xff] %vm41, 0.0
    %v44 = vld [vmem:[%s0] sm:$0xff]
    %46 = vset.pattern.permute.xlu0 0
    %47 = vperm.xlu0 %46, %v29
    %v48 = vpop.permute.xlu0 %47
    %v50 = vmul.f32 %v44, %v48
    %51 = vst [vmem:[#allocation2 + $0x8] sm:$0xff] %v50
    %v52 = vld [vmem:[#allocation2 + $0x8] sm:$0xff]
    %54 = vset.pattern.permute.xlu0 0
    %55 = vperm.xlu0 %54, %v31
    %v56 = vpop.permute.xlu0 %55
    %v58 = vmul.f32 %v56, %v52
    %60 = vset.pattern.permute.xlu0 0
    %61 = vperm.xlu0 %60, %v36
    %v62 = vpop.permute.xlu0 %61
    %v64 = vadd.f32 %v58, %v62
    %v65 = vld [vmem:[#allocation2] sm:$0xff]
    %67 = vset.pattern.permute.xlu0 0
    %68 = vperm.xlu0 %67, %v30
    %v69 = vpop.permute.xlu0 %68
    %v71 = vmul.f32 %v69, %v65
    %v72 = vmul.f32 %v69, %v52
    %75 = vrot.lane.b32.xlu0 %v71, 1
    %v76 = vpop.permute.xlu0 %75
    %77 = vrot.lane.b32.xlu0 %v72, 1
    %v78 = vpop.permute.xlu0 %77
    %vm79 = vcmask 7168
    %v80 = vsel %vm79, %v76, %v78
    %v82 = vadd.f32 %v64, %v80
    %vm83 = vcmp.ge.f32.partialorder %v82, 0.0
    %85 = vset.pattern.permute.xlu0 0
    %86 = vperm.xlu0 %85, %v39
    %v87 = vpop.permute.xlu0 %86
    %v89 = vmul.f32 %v87, %v82
    %v90 = vsel %vm83, %v82, %v89
    %91 = vst [vmem:[#allocation3 + $0x8] sm:$0xff] %v90
    %v92 = vld [vmem:[#allocation3 + $0x8] sm:$0xff]
    %94 = vset.pattern.permute.xlu0 0
    %95 = vperm.xlu0 %94, %v33
    %v96 = vpop.permute.xlu0 %95
    %v98 = vmul.f32 %v96, %v92
    %100 = vset.pattern.permute.xlu0 0
    %101 = vperm.xlu0 %100, %v37
    %v102 = vpop.permute.xlu0 %101
    %v104 = vadd.f32 %v98, %v102
    %v105 = vld [vmem:[#allocation3] sm:$0xff]
    %107 = vset.pattern.permute.xlu0 0
    %108 = vperm.xlu0 %107, %v32
    %v109 = vpop.permute.xlu0 %108
    %v111 = vmul.f32 %v109, %v105
    %v112 = vmul.f32 %v109, %v92
    %115 = vrot.lane.b32.xlu0 %v111, 2
    %v116 = vpop.permute.xlu0 %115
    %117 = vrot.lane.b32.xlu0 %v112, 2
    %v118 = vpop.permute.xlu0 %117
    %vm119 = vcmask 15360
    %v120 = vsel %vm119, %v116, %v118
    %v122 = vadd.f32 %v104, %v120
    %v123 = vadd.f32 %v122, %v92
    %vm124 = vcmp.ge.f32.partialorder %v123, 0.0
    %126 = vset.pattern.permute.xlu0 0
    %127 = vperm.xlu0 %126, %v40
    %v128 = vpop.permute.xlu0 %127
    %v130 = vmul.f32 %v128, %v123
    %v131 = vsel %vm124, %v123, %v130
    %132 = vst [vmem:[#allocation2 + $0x8] sm:$0xff] %v131
    %v133 = vld [vmem:[#allocation2 + $0x8] sm:$0xff]
    %135 = vset.pattern.permute.xlu0 0
    %136 = vperm.xlu0 %135, %v35
    %v137 = vpop.permute.xlu0 %136
    %v139 = vmul.f32 %v137, %v133
    %141 = vset.pattern.permute.xlu0 0
    %142 = vperm.xlu0 %141, %v38
    %v143 = vpop.permute.xlu0 %142
    %v145 = vadd.f32 %v139, %v143
    %v146 = vld [vmem:[#allocation2] sm:$0xff]
    %148 = vset.pattern.permute.xlu0 0
    %149 = vperm.xlu0 %148, %v34
    %v150 = vpop.permute.xlu0 %149
    %v152 = vmul.f32 %v150, %v146
    %v153 = vmul.f32 %v150, %v133
    %156 = vrot.lane.b32.xlu0 %v152, 4
    %v157 = vpop.permute.xlu0 %156
    %158 = vrot.lane.b32.xlu0 %v153, 4
    %v159 = vpop.permute.xlu0 %158
    %vm160 = vcmask 31744
    %v161 = vsel %vm160, %v157, %v159
    %v163 = vadd.f32 %v145, %v161
    %v164 = vadd.f32 %v163, %v133
    %v165 = vld [vmem:[%s5] sm:$0x3]
    %v166 = vld [vmem:[#allocation4] sm:$0x1]
    %v168 = vlaneseq
    %v169 = vshrl.u32 %v168, 7
    %v170 = vsub.s32 0, %v169
    %v171 = vrot.slane %v166, %v170
    %172 = vset.pattern.permute.xlu0 0
    %173 = vperm.xlu0 %172, %v171
    %v174 = vpop.permute.xlu0 %173
    %vm176 = vcmask 64512
    %v178 = vsel %vm176, %v165, 0
    %180 = vmatprep.subr.mxu0 0.0
    %181 = vmatpush1.msra.mxu0 %v164
    %182 = vmatprep.subr.mxu0 0.0
    %183 = vmatpush1.msra.mxu0 0.0
    %184 = vmatprep.subr.mxu0 0.0
    %185 = vmatpush1.msra.mxu0 0.0
    %186 = vmatprep.subr.mxu0 0.0
    %187 = vmatpush1.msra.mxu0 0.0
    %188 = vmatprep.subr.mxu0 0.0
    %189 = vmatpush1.msra.mxu0 0.0
    %190 = vmatprep.subr.mxu0 0.0
    %191 = vmatpush1.msra.mxu0 0.0
    %192 = vmatprep.subr.mxu0 0.0
    %193 = vmatpush1.msra.mxu0 0.0
    %194 = vmatprep.subr.mxu0 0.0
    %195 = vmatpush1.msra.mxu0 0.0
    %196 = vmatprep.subr.mxu0 0.0
    %197 = vmatpush1.msra.mxu0 0.0
    %198 = vmatprep.subr.mxu0 0.0
    %199 = vmatpush1.msra.mxu0 0.0
    %200 = vmatprep.subr.mxu0 0.0
    %201 = vmatpush1.msra.mxu0 0.0
    %202 = vmatprep.subr.mxu0 0.0
    %203 = vmatpush1.msra.mxu0 0.0
    %204 = vmatprep.subr.mxu0 0.0
    %205 = vmatpush1.msra.mxu0 0.0
    %206 = vmatprep.subr.mxu0 0.0
    %207 = vmatpush1.msra.mxu0 0.0
    %208 = vmatprep.subr.mxu0 0.0
    %209 = vmatpush1.msra.mxu0 0.0
    %210 = vmatprep.subr.mxu0 0.0
    %211 = vmatpush1.msra.mxu0 0.0
    %212 = vmatprep.subr.mxu0 0.0
    %213 = vmatpush1.msra.mxu0 0.0
    %214 = vmatprep.subr.mxu0 0.0
    %215 = vmatpush1.msra.mxu0 0.0
    %216 = vmatprep.subr.mxu0 0.0
    %217 = vmatpush1.msra.mxu0 0.0
    %218 = vmatprep.subr.mxu0 0.0
    %219 = vmatpush1.msra.mxu0 0.0
    %220 = vmatprep.subr.mxu0 0.0
    %221 = vmatpush1.msra.mxu0 0.0
    %222 = vmatprep.subr.mxu0 0.0
    %223 = vmatpush1.msra.mxu0 0.0
    %224 = vmatprep.subr.mxu0 0.0
    %225 = vmatpush1.msra.mxu0 0.0
    %226 = vmatprep.subr.mxu0 0.0
    %227 = vmatpush1.msra.mxu0 0.0
    %228 = vmatprep.subr.mxu0 0.0
    %229 = vmatpush1.msra.mxu0 0.0
    %230 = vmatprep.subr.mxu0 0.0
    %231 = vmatpush1.msra.mxu0 0.0
    %232 = vmatprep.subr.mxu0 0.0
    %233 = vmatpush1.msra.mxu0 0.0
    %234 = vmatprep.subr.mxu0 0.0
    %235 = vmatpush1.msra.mxu0 0.0
    %236 = vmatprep.subr.mxu0 0.0
    %237 = vmatpush1.msra.mxu0 0.0
    %238 = vmatprep.subr.mxu0 0.0
    %239 = vmatpush1.msra.mxu0 0.0
    %240 = vmatprep.subr.mxu0 0.0
    %241 = vmatpush1.msra.mxu0 0.0
    %242 = vmatprep.subr.mxu0 0.0
    %243 = vmatpush1.msra.mxu0 0.0
    %244 = vmatprep.mubr.f32.mxu0 0.0
    %245 = vmatmul.mubr.f32.gmra.mrb[0].mxu0 %v178
    %v246 = vpop.f32.mrb[0].mxu0
    %v247 = vadd.f32 %v174, %v246
    %v248 = vpop.f32.mrb[0].mxu0
    %249 = vdwg.mxu0
    %250 = vst [vmem:[#allocation5] sm:$0x3] %v247
    // Predicated region
    $region30: #{tpu_custom_call.1} parent=1 // pred_check
      _
    $region31: #{tpu_custom_call.1} parent=1 // pred_check_branch
      %252 = sbr.rel (0) target = $region33
    $region32: #{tpu_custom_call.1} parent=1 // pred_region
      %s254 = ssub.s32 32, 32
      %255 = vsyncadd [#allocation6], %s254
      %s257 = sshll.u32 [#allocation5], 4
      %s258 = int_to_ptr.vmem [resolvable:$true] %s257
      %260 = dma.vmem_to_hbm [thread:$0]  %s258, 32, %s7, [#allocation6]
    $region33: #{tpu_custom_call.1} parent=1 // pred_fallthru
      _
    // Predicated region
    $region34: #{tpu_custom_call.1} parent=1 // pred_check
      _
    $region35: #{tpu_custom_call.1} parent=1 // pred_check_branch
      %262 = sbr.rel (0) target = $region37
    $region36: #{tpu_custom_call.1} parent=1 // pred_region
      %263 = dma.done [#allocation6], 32
    $region37: #{tpu_custom_call.1} parent=1 // pred_fallthru
      _
    %264 = vsyncpa [#allocation6], 1

</llo_original>
